<compile_context>
chip_gen: v6e
topology: v6e:2x2x1
jax: 0.10.0
libtpu: 0.0.40
codegen_flags: <defaults>
</compile_context>

<pallas_src>
import functools

import jax
import jax.numpy as jnp
from jax.experimental import pallas as pl
from jax.experimental.pallas import tpu as pltpu


def _broadcast_kernel(latents_ref, out_ref):
    # latents_ref : (1, F) flattened latent table. Its block index is (0, 0)
    #               for every grid step, so Pallas DMAs it into VMEM once and
    #               keeps it resident.
    # out_ref     : (TB, F) output tile covering TB batch rows.
    out_ref[...] = jnp.broadcast_to(latents_ref[...], out_ref.shape)


def _choose_batch_tile(batch_size: int, flat_elems: int, itemsize: int,
                       tile_budget_bytes: int = 6 * 1024 * 1024) -> int:
    """Largest batch-tile TB whose output tile fits the per-tile VMEM budget.

    TB must be a multiple of 8 (sublane) or equal to batch_size so the
    BlockSpec satisfies the (8, 128) tiling rule.
    """
    max_tb = max(1, tile_budget_bytes // max(1, flat_elems * itemsize))
    if max_tb >= batch_size:
        return batch_size
    tb = max(8, (max_tb // 8) * 8)
    return batch_size if tb >= batch_size else tb


@functools.partial(jax.jit, static_argnums=(1,))
def perceiver_embeddings(latents: jax.Array, batch_size: int) -> jax.Array:
    """Broadcast latent embeddings across the batch dimension.

    latents : (num_latents, d_latents)
    returns : (batch_size, num_latents, d_latents), same dtype as latents.
    """
    # TODO(synk): if the consumer is also JAX, jnp.broadcast_to fused into the
    # consumer avoids materializing (B, N, D) in HBM entirely; this kernel is
    # the explicit-materialization path required here.
    num_latents, d_latents = latents.shape
    flat = num_latents * d_latents

    # Lane-dense layout: last dim of the output is the full flattened feature
    # axis (free reshape in the wrapper, contiguous memory).
    latents_flat = latents.reshape(1, flat)

    tb = _choose_batch_tile(batch_size, flat, jnp.dtype(latents.dtype).itemsize)
    grid = (pl.cdiv(batch_size, tb),)

    out_flat = pl.pallas_call(
        _broadcast_kernel,
        out_shape=jax.ShapeDtypeStruct((batch_size, flat), latents.dtype),
        grid_spec=pltpu.PrefetchScalarGridSpec(
            num_scalar_prefetch=0,
            grid=grid,
            in_specs=[
                # Whole (flattened) parameter, same block every step -> DMA'd once.
                pl.BlockSpec((1, flat), lambda b: (0, 0)),
            ],
            out_specs=pl.BlockSpec((tb, flat), lambda b: (b, 0)),
        ),
        compiler_params=pltpu.CompilerParams(
            dimension_semantics=("parallel",),
            # Explicit scoped-VMEM limit: ~2 x 6 MiB double-buffered output
            # tile + resident latents fits comfortably; 32 MiB is safe on
            # v5e / v6e (128 MiB physical) and v7x (64 MiB physical).
            vmem_limit_bytes=32 * 1024 * 1024,
        ),
    )(latents_flat)

    return out_flat.reshape(batch_size, num_latents, d_latents)


if __name__ == "__main__":
    # Small shapes consistent with the module.
    batch_size = 2
    num_latents = 8
    d_latents = 32

    # Deterministic parameter init (mirrors torch.randn(num_latents, d_latents)).
    key = jax.random.PRNGKey(0)
    latents = jax.random.normal(key, (num_latents, d_latents), dtype=jnp.float32)

    out = perceiver_embeddings(latents, batch_size)
    out = jax.block_until_ready(out)

    # Reference check: expand == broadcast of latents over batch dim.
    ref = jnp.broadcast_to(latents[None, :, :], (batch_size, num_latents, d_latents))
    assert out.shape == (batch_size, num_latents, d_latents)
    assert out.dtype == latents.dtype
    assert jnp.array_equal(out, ref)

    print("KERNEL_OK")
</pallas_src>

<mosaic_0001>
module attributes {stable_mosaic.version = 11 : i64} {
  func.func @_broadcast_kernel(%arg0: i32, %arg1: memref<1x256xf32, #tpu.memory_space<vmem>>, %arg2: memref<2x256xf32, #tpu.memory_space<vmem>>) attributes {dimension_semantics = [#tpu.dimension_semantics<parallel>], iteration_bounds = array<i64: 1>, scalar_prefetch = 0 : i64, scratch_operands = 0 : i64, tpu.core_type = #tpu.core_type<tc>, window_params = [{pipeline_mode = #tpu.pipeline_mode<synchronous>, transform_indices = @transform_0, window_bounds = array<i64: 1, 256>}, {transform_indices = @transform_1, window_bounds = array<i64: 2, 256>}]} {
    %c0 = arith.constant 0 : index
    %c0_0 = arith.constant 0 : index
    %0 = vector.load %arg1[%c0, %c0_0] : memref<1x256xf32, #tpu.memory_space<vmem>>, vector<1x256xf32>
    %1 = vector.shape_cast %0 : vector<1x256xf32> to vector<1x256xf32>
    %2 = vector.broadcast %1 : vector<1x256xf32> to vector<2x256xf32>
    %c0_1 = arith.constant 0 : index
    %c0_2 = arith.constant 0 : index
    %3 = vector.load %arg2[%c0_1, %c0_2] : memref<2x256xf32, #tpu.memory_space<vmem>>, vector<2x256xf32>
    tpu.vector_store %arg2[%c0_1, %c0_2], %2 {strides = array<i32>} : memref<2x256xf32, #tpu.memory_space<vmem>>, vector<2x256xf32>,
    return
  }
  func.func @transform_0(%arg0: i32) -> (i32, i32) {
    %c0_i32 = arith.constant 0 : i32
    %c0_i32_0 = arith.constant 0 : i32
    %c0_i32_1 = arith.constant 0 : i32
    return %c0_i32, %c0_i32_0 : i32, i32
  }
  func.func @transform_1(%arg0: i32) -> (i32, i32) {
    %c0_i32 = arith.constant 0 : i32
    %c0_i32_0 = arith.constant 0 : i32
    return %arg0, %c0_i32 : i32, i32
  }
}

</mosaic_0001>

<llo_original>
// kernel: perceiver_embeddings.1
$region0: #{perceiver_embeddings.1}
  #allocation0 [shape = 'u32[]', space=smem, size = 0x4, offset = 0x4, fixed_abs, tag = 'smem constant byte address 0x4 - core index']
  #allocation1 [shape = 'u32[144,128]{1,0:T(1,128)}', space=vmem, size = 0x12000, scoped, tag = 'internal scratch']
  %s0 = inlined_call_operand.vmem [shape: f32[1,256], index: 0, kind: input, shape index: {}]
  %s1 = inlined_call_operand.vmem [shape: f32[2,256], index: 1, kind: output, shape index: {}]
  %s2 = sld [smem:[#allocation0]]
  $region14: #{perceiver_embeddings.1} parent=0
    _
  %s4 = ssub.s32 1, %s2
  %s5 = scalar_select 0, %s4, %s2
  // Predicated region
  $region2: #{perceiver_embeddings.1} parent=0 // pred_check
    _
  $region3: #{perceiver_embeddings.1} parent=0 // pred_check_branch
    %7 = sbr.rel (0) target = $region5
  $region4: #{perceiver_embeddings.1} parent=0 // pred_region
    _
  $region5: #{perceiver_embeddings.1} parent=0 // pred_fallthru
    _
  %v8 = vld [vmem:[%s0] sm:$0x3]
  %v10 = vlaneseq
  %v11 = vshrl.u32 %v10, 7
  %v12 = vsub.s32 0, %v11
  %v13 = vrot.slane %v8, %v12
  %v14 = vlaneseq
  %v15 = vshrl.u32 %v14, 7
  %v16 = vsub.s32 1, %v15
  %v17 = vrot.slane %v8, %v16
  %v18 = vcombine.low %v13, %v17
  %v20 = vunpack.c.l.s4 1983009808
  %v21 = vunpack.c.0.s8 %v20
  %v22 = vlaneseq
  %v23 = vshrl.u32 %v22, 7
  %v24 = vsub.s32 %v21, %v23
  %v25 = vrot.slane %v18, %v24
  %27 = vst [vmem:[%s1] sm:$0xf] %v25
  // Predicated region
  $region6: #{perceiver_embeddings.1} parent=0 // pred_check
    _
  $region7: #{perceiver_embeddings.1} parent=0 // pred_check_branch
    %29 = sbr.rel (0) target = $region9
  $region8: #{perceiver_embeddings.1} parent=0 // pred_region
    _
  $region9: #{perceiver_embeddings.1} parent=0 // pred_fallthru
    _
  // Predicated region
  $region10: #{perceiver_embeddings.1} parent=0 // pred_check
    _
  $region11: #{perceiver_embeddings.1} parent=0 // pred_check_branch
    %31 = sbr.rel (0) target = $region13
  $region12: #{perceiver_embeddings.1} parent=0 // pred_region
    _
  $region13: #{perceiver_embeddings.1} parent=0 // pred_fallthru
    _

</llo_original>
